<compile_context>
chip_gen: v7x
topology: tpu7x:2x2x1
jax: 0.10.0
libtpu: 0.0.40
codegen_flags: <defaults>
</compile_context>

<pallas_src>
import functools

import numpy as np
import jax
import jax.numpy as jnp
from jax.experimental import pallas as pl
from jax.experimental.pallas import tpu as pltpu

ALPHA = 0.25   # hard-coded in DetMatcher.forward
GAMMA = 2.0    # hard-coded in DetMatcher.forward
EPS = 1e-8     # focal-cost epsilon (matches the torch module)
TINY = 1e-9    # division guard for degenerate / zero-area box pairs


def _round_up(x, m):
    return ((x + m - 1) // m) * m


def _cost_kernel(prob_ref, sel_ref, qboxt_ref, tbox_ref, ct_ref,
                 *, w_class, w_bbox, w_giou):
    # prob_ref:  (TQ, NC)   "probabilities" (module uses pred_logits directly),
    #                       natural layout — queries on sublanes, classes on lanes
    # sel_ref:   (TNT, NC)  f32 one-hot of (tgt_ids - 1), rows = targets
    # qboxt_ref: (4, TQ)    query boxes cxcywh, transposed (queries on lanes)
    # tbox_ref:  (TNT, 4)   target boxes cxcywh
    # ct_ref:    (TNT, TQ)  output cost tile, TARGET-major (targets x queries)
    dims = (((1,), (1,)), ((), ()))     # contract the class axis of both operands

    p = prob_ref[...]                   # (TQ, NC) f32
    sel = sel_ref[...]                  # (TNT, NC) f32 one-hot (exact in bf16)

    # Exact class gather on the MXU: split p into a bf16-representable high
    # part plus a small residual so each (default-precision) pass is exact to
    # ~2^-17; sum is ~f32-accurate.  K = NC is tiny, so two passes are free.
    p_hi = p.astype(jnp.bfloat16).astype(jnp.float32)
    p_lo = p - p_hi
    p_g = (jax.lax.dot_general(sel, p_hi, dims, preferred_element_type=jnp.float32)
           + jax.lax.dot_general(sel, p_lo, dims, preferred_element_type=jnp.float32))
    # p_g: (TNT, TQ) gathered probabilities (0 for padded/zero one-hot rows)

    # Focal class cost on the *gathered* tile (gamma == 2 -> p**gamma == p*p);
    # EUP/VPU work now scales with the small target count, not num_classes.
    one_m = 1.0 - p_g
    pos = ALPHA * (one_m * one_m) * (-jnp.log(p_g + EPS))
    neg = (1.0 - ALPHA) * (p_g * p_g) * (-jnp.log(one_m + EPS))
    cost_class = pos - neg                                        # (TNT, TQ)

    qb = qboxt_ref[...]                                           # (4, TQ)
    tb = tbox_ref[...]                                            # (TNT, 4)

    qcx, qcy, qw, qh = qb[0:1, :], qb[1:2, :], qb[2:3, :], qb[3:4, :]  # (1,TQ)
    tcx, tcy, tw, th = tb[:, 0:1], tb[:, 1:2], tb[:, 2:3], tb[:, 3:4]  # (TNT,1)

    # L1 cdist on cxcywh coordinates (torch.cdist(p=1))
    cost_bbox = (jnp.abs(tcx - qcx) + jnp.abs(tcy - qcy)
                 + jnp.abs(tw - qw) + jnp.abs(th - qh))           # (TNT, TQ)

    # cxcywh -> xyxy
    qx0, qy0 = qcx - 0.5 * qw, qcy - 0.5 * qh
    qx1, qy1 = qcx + 0.5 * qw, qcy + 0.5 * qh
    tx0, ty0 = tcx - 0.5 * tw, tcy - 0.5 * th
    tx1, ty1 = tcx + 0.5 * tw, tcy + 0.5 * th

    area_q = (qx1 - qx0) * (qy1 - qy0)                            # (1, TQ)
    area_t = (tx1 - tx0) * (ty1 - ty0)                            # (TNT, 1)

    iw = jnp.maximum(jnp.minimum(qx1, tx1) - jnp.maximum(qx0, tx0), 0.0)
    ih = jnp.maximum(jnp.minimum(qy1, ty1) - jnp.maximum(qy0, ty0), 0.0)
    inter = iw * ih                                               # (TNT, TQ)
    union = area_q + area_t - inter
    # EUP reciprocals (otherwise-idle slot); TINY guards degenerate box pairs.
    iou = inter * pl.reciprocal(jnp.maximum(union, TINY), approx=True)

    ew = jnp.maximum(jnp.maximum(qx1, tx1) - jnp.minimum(qx0, tx0), 0.0)
    eh = jnp.maximum(jnp.maximum(qy1, ty1) - jnp.minimum(qy0, ty0), 0.0)
    earea = ew * eh
    giou = iou - (earea - union) * pl.reciprocal(jnp.maximum(earea, TINY),
                                                 approx=True)

    ct_ref[...] = (w_bbox * cost_bbox + w_class * cost_class
                   - w_giou * giou)


def det_matcher_cost(pred_logits, pred_boxes, tgt_ids, tgt_bbox,
                     cost_class=1.0, cost_bbox=1.0, cost_giou=1.0,
                     tq=None, tnt=None):
    """Returns the cost matrix in TARGET-major layout: (NT_pad, NQ_pad),
    where the valid region is [:num_targets, :bs*num_queries] and column
    i*num_queries + q corresponds to query q of batch element i."""
    bs, nq, nc = pred_logits.shape
    nt = int(tgt_bbox.shape[0])
    NQ = bs * nq

    # Query tile (lane axis).  With the gather-first class cost there are no
    # (nc, tq) intermediates, so large tiles are vreg-safe; 128-multiples keep
    # stores unmasked and amortize per-grid-step overhead.
    if tq is None:
        if NQ <= 256:
            tq = 128
        elif NQ <= 2048:
            tq = 256
        else:
            tq = 512
    NQ_pad = _round_up(max(NQ, tq), tq)

    # Target tile (sublane axis).  Tiling NT caps per-block VMEM (v7x: 64 MiB
    # physical); both grid axes are "parallel" so megacore can shard whichever
    # has >= 2 steps.
    if tnt is None:
        tnt = min(256, _round_up(max(nt, 1), 8))
    NT_pad = _round_up(max(nt, 1), tnt)

    out_prob = pred_logits.reshape(NQ, nc).astype(jnp.float32)
    out_bbox = pred_boxes.reshape(NQ, 4).astype(jnp.float32)

    # pred_logits stay in their natural (NQ, nc) layout (no transpose); pad
    # query rows only if needed.  Pad values are benign (0.5 keeps the focal
    # logs finite); padded rows/cols of the output are never read.
    if NQ_pad == NQ:
        prob = out_prob
    else:
        prob = jnp.full((NQ_pad, nc), 0.5, jnp.float32).at[:NQ].set(out_prob)

    # Query boxes transposed (tiny: 4 x NQ) so box coords broadcast on lanes.
    qbox_t = jnp.full((4, NQ_pad), 0.5, jnp.float32).at[:, :NQ].set(out_bbox.T)

    # torch's `[:, tgt_ids - 1]` wraps -1 (label 0) to the last class; `% nc`
    # reproduces that.  (Labels > nc would error in torch; here they wrap.)
    sel = jnp.zeros((NT_pad, nc), jnp.float32).at[:nt].set(
        jax.nn.one_hot((tgt_ids - 1) % nc, nc, dtype=jnp.float32))
    tbox = jnp.full((NT_pad, 4), 0.5, jnp.float32).at[:nt].set(
        tgt_bbox.astype(jnp.float32))

    kernel = functools.partial(_cost_kernel,
                               w_class=float(cost_class),
                               w_bbox=float(cost_bbox),
                               w_giou=float(cost_giou))

    grid = (NQ_pad // tq, NT_pad // tnt)   # targets innermost -> prob tile reused

    # Explicit VMEM budget: double-buffered blocks + elementwise intermediates.
    blk_bytes = 4 * (tq * nc + tnt * nc + 4 * tq + 4 * tnt + tnt * tq)
    vmem_limit = int(min(32 << 20, max(8 << 20, 8 * blk_bytes)))

    flops = int(2 * 2 * NT_pad * nc * NQ_pad + 40 * NT_pad * NQ_pad)
    transcendentals = int(4 * NT_pad * NQ_pad)            # 2 logs + 2 recips
    bytes_accessed = int(4 * (NQ_pad * nc + NT_pad * nc + 4 * NQ_pad
                              + 4 * NT_pad + NT_pad * NQ_pad))

    Ct = pl.pallas_call(
        kernel,
        out_shape=jax.ShapeDtypeStruct((NT_pad, NQ_pad), jnp.float32),
        grid_spec=pltpu.PrefetchScalarGridSpec(
            num_scalar_prefetch=0,
            grid=grid,
            in_specs=[
                pl.BlockSpec((tq, nc), lambda i, j: (i, 0)),     # probs (natural)
                pl.BlockSpec((tnt, nc), lambda i, j: (j, 0)),    # class one-hot
                pl.BlockSpec((4, tq), lambda i, j: (0, i)),      # query boxes^T
                pl.BlockSpec((tnt, 4), lambda i, j: (j, 0)),     # target boxes
            ],
            out_specs=pl.BlockSpec((tnt, tq), lambda i, j: (j, i)),
        ),
        compiler_params=pltpu.CompilerParams(
            dimension_semantics=("parallel", "parallel"),
            vmem_limit_bytes=vmem_limit),
        cost_estimate=pl.CostEstimate(flops=flops,
                                      transcendentals=transcendentals,
                                      bytes_accessed=bytes_accessed),
    )(prob, sel, qbox_t, tbox)

    return Ct


def _linear_sum_assignment(cost):
    try:
        from scipy.optimize import linear_sum_assignment
        return linear_sum_assignment(cost)
    except Exception:
        # TODO(synk): Hungarian algorithm has no Pallas/TPU equivalent; using a
        # greedy host-side fallback when scipy is unavailable.
        cost = np.array(cost, dtype=np.float64, copy=True)
        nr, nc = cost.shape
        rows, cols = [], []
        for _ in range(min(nr, nc)):
            r, c = np.unravel_index(np.argmin(cost), cost.shape)
            rows.append(int(r)); cols.append(int(c))
            cost[r, :] = np.inf
            cost[:, c] = np.inf
        order = np.argsort(rows)
        return np.asarray(rows)[order], np.asarray(cols)[order]


def det_matcher_forward(outputs, targets,
                        cost_class=1.0, cost_bbox=1.0, cost_giou=1.0,
                        cost_ids=1.0):
    """JAX/Pallas equivalent of DetMatcher.forward (is_next=False path).

    Returns (indices, Ct) where Ct is the target-major padded cost matrix."""
    assert cost_class != 0 or cost_bbox != 0 or cost_giou != 0 or cost_ids != 0
    tgt_ids = jnp.concatenate([t["labels"] for t in targets])
    tgt_bbox = jnp.concatenate([t["boxes"] for t in targets])
    sizes = [int(t["boxes"].shape[0]) for t in targets]
    bs, nq = outputs["pred_logits"].shape[:2]

    Ct = det_matcher_cost(outputs["pred_logits"], outputs["pred_boxes"],
                          tgt_ids, tgt_bbox,
                          cost_class=cost_class, cost_bbox=cost_bbox,
                          cost_giou=cost_giou)
    # TODO(synk): is_next/ref_indices inf-masking path not exercised here
    # (default is_next=False); it is pure index masking, not kernel compute.

    # Slice only the per-batch (s x nq) sub-blocks on device; no full-matrix
    # transpose/relayout of the (NT, NQ) cost matrix is ever materialized.
    sub_dev = []
    row = 0
    for i, s in enumerate(sizes):
        sub_dev.append(Ct[row:row + s, i * nq:(i + 1) * nq])
        row += s
    sub_host = jax.device_get(sub_dev)

    indices = []
    for sub in sub_host:
        # Transpose the tiny host block to the (nq, s) orientation torch uses.
        r, c = _linear_sum_assignment(np.asarray(sub, dtype=np.float64).T)
        indices.append((np.asarray(r, dtype=np.int64),
                        np.asarray(c, dtype=np.int64)))
    return indices, Ct


def _reference_cost(pred_logits, pred_boxes, tgt_ids, tgt_bbox,
                    wc=1.0, wb=1.0, wg=1.0):
    """Plain-numpy reference of the cost matrix for verification."""
    bs, nq, nc = pred_logits.shape
    p = np.asarray(pred_logits, np.float64).reshape(bs * nq, nc)
    qb = np.asarray(pred_boxes, np.float64).reshape(bs * nq, 4)
    tb = np.asarray(tgt_bbox, np.float64)
    ids = (np.asarray(tgt_ids) - 1) % nc

    neg = (1 - ALPHA) * p ** GAMMA * (-np.log(1 - p + EPS))
    pos = ALPHA * (1 - p) ** GAMMA * (-np.log(p + EPS))
    cost_class = pos[:, ids] - neg[:, ids]
    cost_bbox = np.abs(qb[:, None, :] - tb[None, :, :]).sum(-1)

    def xyxy(b):
        cx, cy, w, h = b[:, 0], b[:, 1], b[:, 2], b[:, 3]
        return np.stack([cx - w / 2, cy - h / 2, cx + w / 2, cy + h / 2], -1)

    q, t = xyxy(qb), xyxy(tb)
    aq = (q[:, 2] - q[:, 0]) * (q[:, 3] - q[:, 1])
    at = (t[:, 2] - t[:, 0]) * (t[:, 3] - t[:, 1])
    lt = np.maximum(q[:, None, :2], t[None, :, :2])
    rb = np.minimum(q[:, None, 2:], t[None, :, 2:])
    wh = np.clip(rb - lt, 0, None)
    inter = wh[..., 0] * wh[..., 1]
    union = aq[:, None] + at[None, :] - inter
    iou = inter / union
    elt = np.minimum(q[:, None, :2], t[None, :, :2])
    erb = np.maximum(q[:, None, 2:], t[None, :, 2:])
    ewh = np.clip(erb - elt, 0, None)
    earea = ewh[..., 0] * ewh[..., 1]
    giou = iou - (earea - union) / earea
    C = wb * cost_bbox + wc * cost_class + wg * (-giou)
    return C.reshape(bs, nq, -1)


if __name__ == "__main__":
    key = jax.random.PRNGKey(0)
    bs, num_queries, num_classes = 2, 128, 32
    n_tgt_per_batch = [3, 5]

    k1, k2, k3, k4 = jax.random.split(key, 4)
    # module consumes pred_logits directly as probabilities -> sample in (0,1)
    pred_logits = jax.random.uniform(k1, (bs, num_queries, num_classes),
                                     jnp.float32, 0.02, 0.98)
    # boxes in cxcywh, well inside the unit square
    pred_boxes = jnp.concatenate([
        jax.random.uniform(k2, (bs, num_queries, 2), jnp.float32, 0.25, 0.75),
        jax.random.uniform(k3, (bs, num_queries, 2), jnp.float32, 0.10, 0.30),
    ], axis=-1)

    targets = []
    tk = k4
    for n in n_tgt_per_batch:
        tk, ka, kb, kc = jax.random.split(tk, 4)
        boxes = jnp.concatenate([
            jax.random.uniform(ka, (n, 2), jnp.float32, 0.25, 0.75),
            jax.random.uniform(kb, (n, 2), jnp.float32, 0.10, 0.30),
        ], axis=-1)
        labels = jax.random.randint(kc, (n,), 1, num_classes + 1, jnp.int32)
        targets.append({"labels": labels, "boxes": boxes,
                        "ids": jnp.arange(n, dtype=jnp.int32)})

    outputs = {"pred_logits": pred_logits, "pred_boxes": pred_boxes}

    indices, Ct = det_matcher_forward(outputs, targets)
    Ct = jax.block_until_ready(Ct)

    # Verify the Pallas cost matrix against a plain-numpy reference (tolerance
    # covers the approximate EUP reciprocals in the IoU/GIoU terms).
    tgt_ids = jnp.concatenate([t["labels"] for t in targets])
    tgt_bbox = jnp.concatenate([t["boxes"] for t in targets])
    nt = int(tgt_bbox.shape[0])
    NQ = bs * num_queries
    C_ref = _reference_cost(pred_logits, pred_boxes, tgt_ids, tgt_bbox)
    Ct_host = np.asarray(jax.device_get(Ct))[:nt, :NQ]          # (nt, NQ)
    C_ref_t = C_ref.reshape(NQ, nt).T                           # (nt, NQ)
    np.testing.assert_allclose(Ct_host, C_ref_t, rtol=1e-2, atol=1e-2)

    # sanity: matching sizes follow min(num_queries, num_targets)
    for (ri, ci), n in zip(indices, n_tgt_per_batch):
        assert len(ri) == len(ci) == min(num_queries, n)

    print("KERNEL_OK")
</pallas_src>

<mosaic_0001>
module attributes {stable_mosaic.version = 11 : i64} {
  func.func @_cost_kernel(%arg0: i32, %arg1: i32, %arg2: memref<128x32xf32, #tpu.memory_space<vmem>>, %arg3: memref<8x32xf32, #tpu.memory_space<vmem>>, %arg4: memref<4x128xf32, #tpu.memory_space<vmem>>, %arg5: memref<8x4xf32, #tpu.memory_space<vmem>>, %arg6: memref<8x128xf32, #tpu.memory_space<vmem>>) attributes {dimension_semantics = [#tpu.dimension_semantics<parallel>, #tpu.dimension_semantics<parallel>], iteration_bounds = array<i64: 2, 1>, scalar_prefetch = 0 : i64, scratch_operands = 0 : i64, tpu.core_type = #tpu.core_type<tc>, window_params = [{transform_indices = @transform_0, window_bounds = array<i64: 128, 32>}, {transform_indices = @transform_1, window_bounds = array<i64: 8, 32>}, {transform_indices = @transform_2, window_bounds = array<i64: 4, 128>}, {transform_indices = @transform_3, window_bounds = array<i64: 8, 4>}, {transform_indices = @transform_4, window_bounds = array<i64: 8, 128>}]} {
    %c0 = arith.constant 0 : index
    %c0_0 = arith.constant 0 : index
    %0 = vector.load %arg2[%c0, %c0_0] : memref<128x32xf32, #tpu.memory_space<vmem>>, vector<128x32xf32>
    %c0_1 = arith.constant 0 : index
    %c0_2 = arith.constant 0 : index
    %1 = vector.load %arg3[%c0_1, %c0_2] : memref<8x32xf32, #tpu.memory_space<vmem>>, vector<8x32xf32>
    %2 = arith.truncf %0 : vector<128x32xf32> to vector<128x32xbf16>
    %3 = arith.extf %2 : vector<128x32xbf16> to vector<128x32xf32>
    %4 = arith.subf %0, %3 : vector<128x32xf32>
    %cst = arith.constant dense<0.000000e+00> : vector<8x128xf32>
    %5 = tpu.matmul %1, %3, %cst {dimension_numbers = #tpu.dot_dimension_numbers<[1], [1], [0], [0], [0, 0, 1, 0], [], []>} : vector<8x32xf32>, vector<128x32xf32>, vector<8x128xf32> -> vector<8x128xf32>
    %cst_3 = arith.constant dense<0.000000e+00> : vector<8x128xf32>
    %6 = tpu.matmul %1, %4, %cst_3 {dimension_numbers = #tpu.dot_dimension_numbers<[1], [1], [0], [0], [0, 0, 1, 0], [], []>} : vector<8x32xf32>, vector<128x32xf32>, vector<8x128xf32> -> vector<8x128xf32>
    %7 = arith.addf %5, %6 : vector<8x128xf32>
    %cst_4 = arith.constant 1.000000e+00 : f32
    %8 = vector.broadcast %cst_4 : f32 to vector<8x128xf32>
    %9 = arith.subf %8, %7 : vector<8x128xf32>
    %10 = arith.mulf %9, %9 : vector<8x128xf32>
    %cst_5 = arith.constant 2.500000e-01 : f32
    %11 = vector.broadcast %cst_5 : f32 to vector<8x128xf32>
    %12 = arith.mulf %11, %10 : vector<8x128xf32>
    %cst_6 = arith.constant 9.99999993E-9 : f32
    %13 = vector.broadcast %cst_6 : f32 to vector<8x128xf32>
    %14 = arith.addf %7, %13 : vector<8x128xf32>
    %15 = math.log %14 : vector<8x128xf32>
    %cst_7 = arith.constant 0.000000e+00 : f32
    %16 = vector.broadcast %cst_7 : f32 to vector<8x128xf32>
    %17 = arith.subf %16, %15 : vector<8x128xf32>
    %18 = arith.mulf %12, %17 : vector<8x128xf32>
    %19 = arith.mulf %7, %7 : vector<8x128xf32>
    %cst_8 = arith.constant 7.500000e-01 : f32
    %20 = vector.broadcast %cst_8 : f32 to vector<8x128xf32>
    %21 = arith.mulf %20, %19 : vector<8x128xf32>
    %cst_9 = arith.constant 9.99999993E-9 : f32
    %22 = vector.broadcast %cst_9 : f32 to vector<8x128xf32>
    %23 = arith.addf %9, %22 : vector<8x128xf32>
    %24 = math.log %23 : vector<8x128xf32>
    %cst_10 = arith.constant 0.000000e+00 : f32
    %25 = vector.broadcast %cst_10 : f32 to vector<8x128xf32>
    %26 = arith.subf %25, %24 : vector<8x128xf32>
    %27 = arith.mulf %21, %26 : vector<8x128xf32>
    %28 = arith.subf %18, %27 : vector<8x128xf32>
    %c0_11 = arith.constant 0 : index
    %c0_12 = arith.constant 0 : index
    %29 = vector.load %arg4[%c0_11, %c0_12] : memref<4x128xf32, #tpu.memory_space<vmem>>, vector<4x128xf32>
    %c0_13 = arith.constant 0 : index
    %c0_14 = arith.constant 0 : index
    %30 = vector.load %arg5[%c0_13, %c0_14] : memref<8x4xf32, #tpu.memory_space<vmem>>, vector<8x4xf32>
    %31 = vector.extract_strided_slice %29 {offsets = [0, 0], sizes = [1, 128], strides = [1, 1]} : vector<4x128xf32> to vector<1x128xf32>
    %32 = vector.extract_strided_slice %29 {offsets = [1, 0], sizes = [1, 128], strides = [1, 1]} : vector<4x128xf32> to vector<1x128xf32>
    %33 = vector.extract_strided_slice %29 {offsets = [2, 0], sizes = [1, 128], strides = [1, 1]} : vector<4x128xf32> to vector<1x128xf32>
    %34 = vector.extract_strided_slice %29 {offsets = [3, 0], sizes = [1, 128], strides = [1, 1]} : vector<4x128xf32> to vector<1x128xf32>
    %35 = vector.extract_strided_slice %30 {offsets = [0, 0], sizes = [8, 1], strides = [1, 1]} : vector<8x4xf32> to vector<8x1xf32>
    %36 = vector.extract_strided_slice %30 {offsets = [0, 1], sizes = [8, 1], strides = [1, 1]} : vector<8x4xf32> to vector<8x1xf32>
    %37 = vector.extract_strided_slice %30 {offsets = [0, 2], sizes = [8, 1], strides = [1, 1]} : vector<8x4xf32> to vector<8x1xf32>
    %38 = vector.extract_strided_slice %30 {offsets = [0, 3], sizes = [8, 1], strides = [1, 1]} : vector<8x4xf32> to vector<8x1xf32>
    %39 = vector.broadcast %35 : vector<8x1xf32> to vector<8x128xf32>
    %40 = vector.broadcast %31 : vector<1x128xf32> to vector<8x128xf32>
    %41 = arith.subf %39, %40 : vector<8x128xf32>
    %42 = math.absf %41 : vector<8x128xf32>
    %43 = vector.broadcast %36 : vector<8x1xf32> to vector<8x128xf32>
    %44 = vector.broadcast %32 : vector<1x128xf32> to vector<8x128xf32>
    %45 = arith.subf %43, %44 : vector<8x128xf32>
    %46 = math.absf %45 : vector<8x128xf32>
    %47 = arith.addf %42, %46 : vector<8x128xf32>
    %48 = vector.broadcast %37 : vector<8x1xf32> to vector<8x128xf32>
    %49 = vector.broadcast %33 : vector<1x128xf32> to vector<8x128xf32>
    %50 = arith.subf %48, %49 : vector<8x128xf32>
    %51 = math.absf %50 : vector<8x128xf32>
    %52 = arith.addf %47, %51 : vector<8x128xf32>
    %53 = vector.broadcast %38 : vector<8x1xf32> to vector<8x128xf32>
    %54 = vector.broadcast %34 : vector<1x128xf32> to vector<8x128xf32>
    %55 = arith.subf %53, %54 : vector<8x128xf32>
    %56 = math.absf %55 : vector<8x128xf32>
    %57 = arith.addf %52, %56 : vector<8x128xf32>
    %cst_15 = arith.constant 5.000000e-01 : f32
    %58 = vector.broadcast %cst_15 : f32 to vector<1x128xf32>
    %59 = arith.mulf %58, %33 : vector<1x128xf32>
    %60 = arith.subf %31, %59 : vector<1x128xf32>
    %cst_16 = arith.constant 5.000000e-01 : f32
    %61 = vector.broadcast %cst_16 : f32 to vector<1x128xf32>
    %62 = arith.mulf %61, %34 : vector<1x128xf32>
    %63 = arith.subf %32, %62 : vector<1x128xf32>
    %cst_17 = arith.constant 5.000000e-01 : f32
    %64 = vector.broadcast %cst_17 : f32 to vector<1x128xf32>
    %65 = arith.mulf %64, %33 : vector<1x128xf32>
    %66 = arith.addf %31, %65 : vector<1x128xf32>
    %cst_18 = arith.constant 5.000000e-01 : f32
    %67 = vector.broadcast %cst_18 : f32 to vector<1x128xf32>
    %68 = arith.mulf %67, %34 : vector<1x128xf32>
    %69 = arith.addf %32, %68 : vector<1x128xf32>
    %cst_19 = arith.constant 5.000000e-01 : f32
    %70 = vector.broadcast %cst_19 : f32 to vector<8x1xf32>
    %71 = arith.mulf %70, %37 : vector<8x1xf32>
    %72 = arith.subf %35, %71 : vector<8x1xf32>
    %cst_20 = arith.constant 5.000000e-01 : f32
    %73 = vector.broadcast %cst_20 : f32 to vector<8x1xf32>
    %74 = arith.mulf %73, %38 : vector<8x1xf32>
    %75 = arith.subf %36, %74 : vector<8x1xf32>
    %cst_21 = arith.constant 5.000000e-01 : f32
    %76 = vector.broadcast %cst_21 : f32 to vector<8x1xf32>
    %77 = arith.mulf %76, %37 : vector<8x1xf32>
    %78 = arith.addf %35, %77 : vector<8x1xf32>
    %cst_22 = arith.constant 5.000000e-01 : f32
    %79 = vector.broadcast %cst_22 : f32 to vector<8x1xf32>
    %80 = arith.mulf %79, %38 : vector<8x1xf32>
    %81 = arith.addf %36, %80 : vector<8x1xf32>
    %82 = arith.subf %66, %60 : vector<1x128xf32>
    %83 = arith.subf %69, %63 : vector<1x128xf32>
    %84 = arith.mulf %82, %83 : vector<1x128xf32>
    %85 = arith.subf %78, %72 : vector<8x1xf32>
    %86 = arith.subf %81, %75 : vector<8x1xf32>
    %87 = arith.mulf %85, %86 : vector<8x1xf32>
    %88 = vector.broadcast %66 : vector<1x128xf32> to vector<8x128xf32>
    %89 = vector.broadcast %78 : vector<8x1xf32> to vector<8x128xf32>
    %90 = arith.minimumf %88, %89 : vector<8x128xf32>
    %91 = vector.broadcast %60 : vector<1x128xf32> to vector<8x128xf32>
    %92 = vector.broadcast %72 : vector<8x1xf32> to vector<8x128xf32>
    %93 = arith.maximumf %91, %92 : vector<8x128xf32>
    %94 = arith.subf %90, %93 : vector<8x128xf32>
    %cst_23 = arith.constant 0.000000e+00 : f32
    %95 = vector.broadcast %cst_23 : f32 to vector<8x128xf32>
    %96 = arith.maximumf %94, %95 : vector<8x128xf32>
    %97 = vector.broadcast %69 : vector<1x128xf32> to vector<8x128xf32>
    %98 = vector.broadcast %81 : vector<8x1xf32> to vector<8x128xf32>
    %99 = arith.minimumf %97, %98 : vector<8x128xf32>
    %100 = vector.broadcast %63 : vector<1x128xf32> to vector<8x128xf32>
    %101 = vector.broadcast %75 : vector<8x1xf32> to vector<8x128xf32>
    %102 = arith.maximumf %100, %101 : vector<8x128xf32>
    %103 = arith.subf %99, %102 : vector<8x128xf32>
    %cst_24 = arith.constant 0.000000e+00 : f32
    %104 = vector.broadcast %cst_24 : f32 to vector<8x128xf32>
    %105 = arith.maximumf %103, %104 : vector<8x128xf32>
    %106 = arith.mulf %96, %105 : vector<8x128xf32>
    %107 = vector.broadcast %84 : vector<1x128xf32> to vector<8x128xf32>
    %108 = vector.broadcast %87 : vector<8x1xf32> to vector<8x128xf32>
    %109 = arith.addf %107, %108 : vector<8x128xf32>
    %110 = arith.subf %109, %106 : vector<8x128xf32>
    %cst_25 = arith.constant 9.99999971E-10 : f32
    %111 = vector.broadcast %cst_25 : f32 to vector<8x128xf32>
    %112 = arith.maximumf %110, %111 : vector<8x128xf32>
    %113 = tpu.reciprocal %112 {approx = true} : vector<8x128xf32> -> vector<8x128xf32>
    %114 = arith.mulf %106, %113 : vector<8x128xf32>
    %115 = vector.broadcast %66 : vector<1x128xf32> to vector<8x128xf32>
    %116 = vector.broadcast %78 : vector<8x1xf32> to vector<8x128xf32>
    %117 = arith.maximumf %115, %116 : vector<8x128xf32>
    %118 = vector.broadcast %60 : vector<1x128xf32> to vector<8x128xf32>
    %119 = vector.broadcast %72 : vector<8x1xf32> to vector<8x128xf32>
    %120 = arith.minimumf %118, %119 : vector<8x128xf32>
    %121 = arith.subf %117, %120 : vector<8x128xf32>
    %cst_26 = arith.constant 0.000000e+00 : f32
    %122 = vector.broadcast %cst_26 : f32 to vector<8x128xf32>
    %123 = arith.maximumf %121, %122 : vector<8x128xf32>
    %124 = vector.broadcast %69 : vector<1x128xf32> to vector<8x128xf32>
    %125 = vector.broadcast %81 : vector<8x1xf32> to vector<8x128xf32>
    %126 = arith.maximumf %124, %125 : vector<8x128xf32>
    %127 = vector.broadcast %63 : vector<1x128xf32> to vector<8x128xf32>
    %128 = vector.broadcast %75 : vector<8x1xf32> to vector<8x128xf32>
    %129 = arith.minimumf %127, %128 : vector<8x128xf32>
    %130 = arith.subf %126, %129 : vector<8x128xf32>
    %cst_27 = arith.constant 0.000000e+00 : f32
    %131 = vector.broadcast %cst_27 : f32 to vector<8x128xf32>
    %132 = arith.maximumf %130, %131 : vector<8x128xf32>
    %133 = arith.mulf %123, %132 : vector<8x128xf32>
    %134 = arith.subf %133, %110 : vector<8x128xf32>
    %cst_28 = arith.constant 9.99999971E-10 : f32
    %135 = vector.broadcast %cst_28 : f32 to vector<8x128xf32>
    %136 = arith.maximumf %133, %135 : vector<8x128xf32>
    %137 = tpu.reciprocal %136 {approx = true} : vector<8x128xf32> -> vector<8x128xf32>
    %138 = arith.mulf %134, %137 : vector<8x128xf32>
    %139 = arith.subf %114, %138 : vector<8x128xf32>
    %cst_29 = arith.constant 1.000000e+00 : f32
    %140 = vector.broadcast %cst_29 : f32 to vector<8x128xf32>
    %141 = arith.mulf %140, %57 : vector<8x128xf32>
    %cst_30 = arith.constant 1.000000e+00 : f32
    %142 = vector.broadcast %cst_30 : f32 to vector<8x128xf32>
    %143 = arith.mulf %142, %28 : vector<8x128xf32>
    %144 = arith.addf %141, %143 : vector<8x128xf32>
    %cst_31 = arith.constant 1.000000e+00 : f32
    %145 = vector.broadcast %cst_31 : f32 to vector<8x128xf32>
    %146 = arith.mulf %145, %139 : vector<8x128xf32>
    %147 = arith.subf %144, %146 : vector<8x128xf32>
    %c0_32 = arith.constant 0 : index
    %c0_33 = arith.constant 0 : index
    %148 = vector.load %arg6[%c0_32, %c0_33] : memref<8x128xf32, #tpu.memory_space<vmem>>, vector<8x128xf32>
    tpu.vector_store %arg6[%c0_32, %c0_33], %147 {strides = array<i32>} : memref<8x128xf32, #tpu.memory_space<vmem>>, vector<8x128xf32>,
    return
  }
  func.func @transform_0(%arg0: i32, %arg1: i32) -> (i32, i32) {
    %c0_i32 = arith.constant 0 : i32
    %c0_i32_0 = arith.constant 0 : i32
    return %arg0, %c0_i32 : i32, i32
  }
  func.func @transform_1(%arg0: i32, %arg1: i32) -> (i32, i32) {
    %c0_i32 = arith.constant 0 : i32
    %c0_i32_0 = arith.constant 0 : i32
    return %arg1, %c0_i32 : i32, i32
  }
  func.func @transform_2(%arg0: i32, %arg1: i32) -> (i32, i32) {
    %c0_i32 = arith.constant 0 : i32
    %c0_i32_0 = arith.constant 0 : i32
    return %c0_i32, %arg0 : i32, i32
  }
  func.func @transform_3(%arg0: i32, %arg1: i32) -> (i32, i32) {
    %c0_i32 = arith.constant 0 : i32
    %c0_i32_0 = arith.constant 0 : i32
    return %arg1, %c0_i32 : i32, i32
  }
  func.func @transform_4(%arg0: i32, %arg1: i32) -> (i32, i32) {
    %c0_i32 = arith.constant 0 : i32
    return %arg1, %arg0 : i32, i32
  }
}

</mosaic_0001>

<llo_original>
// kernel: tpu_custom_call.1
$region0: #{tpu_custom_call.1}
  #allocation0 [shape = 'u32[]', space=smem, size = 0x4, offset = 0x4, fixed_abs, tag = 'smem constant byte address 0x4 - core index']
  #allocation1 [shape = 'u32[144,128]{1,0:T(1,128)}', space=vmem, size = 0x12000, scoped, tag = 'internal scratch']
  %s0 = inlined_call_operand.vmem [shape: f32[256,32], index: 0, kind: input, shape index: {}]
  %s1 = inlined_call_operand.vmem [shape: f32[8,32], index: 1, kind: input, shape index: {}]
  %s2 = inlined_call_operand.vmem [shape: f32[4,256], index: 2, kind: input, shape index: {}]
  %s3 = inlined_call_operand.vmem [shape: f32[8,4], index: 3, kind: input, shape index: {}]
  %s4 = inlined_call_operand.hbm [shape: f32[8,256], index: 4, kind: output, shape index: {}]
  %s5 = sld [smem:[#allocation0]]
  $region49: #{tpu_custom_call.1} parent=0
    _
  %s7 = ssub.s32 1, %s5
  %s8 = scalar_select 0, %s7, %s5
  $region1: #{tpu_custom_call.1} parent=0
    #allocation2 [shape = 'u8[8192]{0}', space=vmem, size = 0x2000, scoped, tag = 'output window, operand 0']
    #allocation3 [shape = 's32[2]{0}', space=sflag, size = 0x8, scoped, tag = 'scoped memory for tpu_custom_call.1']
    %9 = vsyncpa [#allocation3], 0
    %s10 = scalar_lea.sflag [#allocation3], 1
    %11 = vsyncpa %s10, 0
    loop: start=0, step=1, limit=4
    $region2: #{tpu_custom_call.1} parent=1 // loop_pre_header
      _
    $region3: #{tpu_custom_call.1} parent=1 // loop_header
      %s13 = sphi 0, %s17
      %p14 = scmp.ge.s32.totalorder %s13, 4
      %s20 = sphi 0, %s32
      %s21 = sphi 0, %s28
      %s22 = sphi 0, %s20
      %s23 = sphi 0, %s21
      %s24 = sphi 0, %s22
      %s25 = sphi 0, %s23
      %s35 = sphi 0, %s37
      %s38 = sphi 0, %s35
      %s39 = sphi 0, %s38
      %s55 = sphi 0, %s39
      %s61 = sphi 0, %s63
      %s64 = sphi 0, %s61
      %s65 = sphi 0, %s64
      %s81 = sphi 0, %s65
      %s87 = sphi 0, %s89
      %s90 = sphi 0, %s87
      %s91 = sphi 0, %s90
      %s107 = sphi 0, %s91
      %s113 = sphi 0, %s115
      %s116 = sphi 0, %s113
      %s117 = sphi 0, %s116
      %s133 = sphi 0, %s117
      %s141 = sphi 0, %s143
      %s144 = sphi 0, %s141
      %s145 = sphi 0, %s144
      %s161 = sphi 0, %s145
    $region4: #{tpu_custom_call.1} parent=1 // loop_header_branch
      %16 = sbr.rel (%p14) target = $region8
    $region5: #{tpu_custom_call.1} parent=1 // loop_body
      %s18 = ssub.s32 %s13, 1
      %s19 = ssub.s32 %s13, 2
      %s26 = sadd.s32 1, %s21
      %p27 = scmp.ge.s32.totalorder %s26, 1
      %s28 = scalar_select %p27, 0, %s26
      %s29 = sadd.s32 1, %s20
      %s30 = scalar_select %p27, %s29, %s20
      %p31 = scmp.ge.s32.totalorder %s30, 2
      %s32 = scalar_select %p31, 0, %s30
      %s33 = ssub.s32 %s20, %s32
      %p34 = scmp.eq.s32.totalorder %s33, 0
      %s36 = sadd.s32 %s35, 1
      %s37 = scalar_select %p34, %s35, %s36
      %p40 = pneg %p34
      %p41 = scmp.eq.s32.totalorder %s13, 1
      %p42 = por %p40, %p41
      %p43 = scmp.ne.s32.totalorder %s35, %s38
      %p44 = scmp.eq.s32.totalorder %s13, 0
      %p45 = por %p43, %p44
      %p46 = scmp.ne.s32.totalorder %s35, %s38
      %p47 = scmp.eq.s32.totalorder %s18, 1
      %p48 = por %p46, %p47
      %p49 = scmp.ne.s32.totalorder %s38, %s39
      %p50 = scmp.eq.s32.totalorder %s18, 0
      %p51 = por %p49, %p50
      %p52 = scmp.ne.s32.totalorder %s38, %s39
      %p53 = scmp.eq.s32.totalorder %s19, 1
      %p54 = por %p52, %p53
      %p56 = scmp.ne.s32.totalorder %s39, %s55
      %p57 = scmp.eq.s32.totalorder %s19, 0
      %p58 = por %p56, %p57
      %s59 = ssub.s32 %s21, %s28
      %p60 = scmp.eq.s32.totalorder %s59, 0
      %s62 = sadd.s32 %s61, 1
      %s63 = scalar_select %p60, %s61, %s62
      %p66 = pneg %p60
      %p67 = scmp.eq.s32.totalorder %s13, 1
      %p68 = por %p66, %p67
      %p69 = scmp.ne.s32.totalorder %s61, %s64
      %p70 = scmp.eq.s32.totalorder %s13, 0
      %p71 = por %p69, %p70
      %p72 = scmp.ne.s32.totalorder %s61, %s64
      %p73 = scmp.eq.s32.totalorder %s18, 1
      %p74 = por %p72, %p73
      %p75 = scmp.ne.s32.totalorder %s64, %s65
      %p76 = scmp.eq.s32.totalorder %s18, 0
      %p77 = por %p75, %p76
      %p78 = scmp.ne.s32.totalorder %s64, %s65
      %p79 = scmp.eq.s32.totalorder %s19, 1
      %p80 = por %p78, %p79
      %p82 = scmp.ne.s32.totalorder %s65, %s81
      %p83 = scmp.eq.s32.totalorder %s19, 0
      %p84 = por %p82, %p83
      %s85 = ssub.s32 %s20, %s32
      %p86 = scmp.eq.s32.totalorder %s85, 0
      %s88 = sadd.s32 %s87, 1
      %s89 = scalar_select %p86, %s87, %s88
      %p92 = pneg %p86
      %p93 = scmp.eq.s32.totalorder %s13, 1
      %p94 = por %p92, %p93
      %p95 = scmp.ne.s32.totalorder %s87, %s90
      %p96 = scmp.eq.s32.totalorder %s13, 0
      %p97 = por %p95, %p96
      %p98 = scmp.ne.s32.totalorder %s87, %s90
      %p99 = scmp.eq.s32.totalorder %s18, 1
      %p100 = por %p98, %p99
      %p101 = scmp.ne.s32.totalorder %s90, %s91
      %p102 = scmp.eq.s32.totalorder %s18, 0
      %p103 = por %p101, %p102
      %p104 = scmp.ne.s32.totalorder %s90, %s91
      %p105 = scmp.eq.s32.totalorder %s19, 1
      %p106 = por %p104, %p105
      %p108 = scmp.ne.s32.totalorder %s91, %s107
      %p109 = scmp.eq.s32.totalorder %s19, 0
      %p110 = por %p108, %p109
      %s111 = ssub.s32 %s21, %s28
      %p112 = scmp.eq.s32.totalorder %s111, 0
      %s114 = sadd.s32 %s113, 1
      %s115 = scalar_select %p112, %s113, %s114
      %p118 = pneg %p112
      %p119 = scmp.eq.s32.totalorder %s13, 1
      %p120 = por %p118, %p119
      %p121 = scmp.ne.s32.totalorder %s113, %s116
      %p122 = scmp.eq.s32.totalorder %s13, 0
      %p123 = por %p121, %p122
      %p124 = scmp.ne.s32.totalorder %s113, %s116
      %p125 = scmp.eq.s32.totalorder %s18, 1
      %p126 = por %p124, %p125
      %p127 = scmp.ne.s32.totalorder %s116, %s117
      %p128 = scmp.eq.s32.totalorder %s18, 0
      %p129 = por %p127, %p128
      %p130 = scmp.ne.s32.totalorder %s116, %s117
      %p131 = scmp.eq.s32.totalorder %s19, 1
      %p132 = por %p130, %p131
      %p134 = scmp.ne.s32.totalorder %s117, %s133
      %p135 = scmp.eq.s32.totalorder %s19, 0
      %p136 = por %p134, %p135
      %s137 = ssub.s32 %s21, %s28
      %s138 = ssub.s32 %s20, %s32
      %s139 = sor.u32 %s137, %s138
      %p140 = scmp.eq.s32.totalorder %s139, 0
      %s142 = sadd.s32 %s141, 1
      %s143 = scalar_select %p140, %s141, %s142
      %p146 = pneg %p140
      %p147 = scmp.eq.s32.totalorder %s13, 1
      %p148 = por %p146, %p147
      %p149 = scmp.ne.s32.totalorder %s141, %s144
      %p150 = scmp.eq.s32.totalorder %s13, 0
      %p151 = por %p149, %p150
      %p152 = scmp.ne.s32.totalorder %s141, %s144
      %p153 = scmp.eq.s32.totalorder %s18, 1
      %p154 = por %p152, %p153
      %p155 = scmp.ne.s32.totalorder %s144, %s145
      %p156 = scmp.eq.s32.totalorder %s18, 0
      %p157 = por %p155, %p156
      %p158 = scmp.ne.s32.totalorder %s144, %s145
      %p159 = scmp.eq.s32.totalorder %s19, 1
      %p160 = por %p158, %p159
      %p162 = scmp.ne.s32.totalorder %s145, %s161
      %p163 = scmp.eq.s32.totalorder %s19, 0
      %p164 = por %p162, %p163
      %p165 = scmp.le.s32.totalorder 1, %s13
      %p166 = scmp.lt.s32.totalorder %s13, 3
      %p167 = pnand %p165, %p166
      %p168 = pneg %p167
      // Predicated region
      $region9: #{tpu_custom_call.1} parent=5 // pred_check
        _
      $region10: #{tpu_custom_call.1} parent=5 // pred_check_branch
        %170 = sbr.rel (%p167) target = $region12
      $region11: #{tpu_custom_call.1} parent=5 // pred_region
        %s171 = ssub.s32 %s13, 1
        // Predicated region
        $region13: #{tpu_custom_call.1} parent=11 // pred_check
          %p172 = pneg %p77
        $region14: #{tpu_custom_call.1} parent=11 // pred_check_branch
          %174 = sbr.rel (%p172) target = $region16
        $region15: #{tpu_custom_call.1} parent=11 // pred_region
          %p175 = scmp.lt.s32.totalorder %s23, 0
          %s176 = scalar_select %p175, %s23, 0
          %s177 = smul.addr %s176, 8
          %s178 = scalar_lea.vmem %s1, %s177
        $region16: #{tpu_custom_call.1} parent=11 // pred_fallthru
          _
        // Predicated region
        $region17: #{tpu_custom_call.1} parent=11 // pred_check
          %p179 = pneg %p129
        $region18: #{tpu_custom_call.1} parent=11 // pred_check_branch
          %181 = sbr.rel (%p179) target = $region20
        $region19: #{tpu_custom_call.1} parent=11 // pred_region
          %p182 = scmp.lt.s32.totalorder %s23, 0
          %s183 = scalar_select %p182, %s23, 0
          %s184 = smul.addr %s183, 8
          %s185 = scalar_lea.vmem %s3, %s184
        $region20: #{tpu_custom_call.1} parent=11 // pred_fallthru
          _
      $region12: #{tpu_custom_call.1} parent=5 // pred_fallthru
        _
      %p186 = scmp.lt.s32.totalorder %s13, 2
      // Predicated region
      $region21: #{tpu_custom_call.1} parent=5 // pred_check
        %p187 = pneg %p186
      $region22: #{tpu_custom_call.1} parent=5 // pred_check_branch
        %189 = sbr.rel (%p187) target = $region24
      $region23: #{tpu_custom_call.1} parent=5 // pred_region
        // Predicated region
        $region25: #{tpu_custom_call.1} parent=23 // pred_check
          %p190 = pneg %p45
        $region26: #{tpu_custom_call.1} parent=23 // pred_check_branch
          %192 = sbr.rel (%p190) target = $region28
        $region27: #{tpu_custom_call.1} parent=23 // pred_region
          %s193 = smul.u32 16, %s20
          %p194 = scmp.lt.s32.totalorder %s193, 31
          %s195 = scalar_select %p194, %s193, 31
          %s196 = smul.addr %s195, 8
          %s197 = scalar_lea.vmem %s0, %s196
          %s198 = smul.u32 16, %s20
        $region28: #{tpu_custom_call.1} parent=23 // pred_fallthru
          _
        // Predicated region
        $region29: #{tpu_custom_call.1} parent=23 // pred_check
          %p199 = pneg %p97
        $region30: #{tpu_custom_call.1} parent=23 // pred_check_branch
          %201 = sbr.rel (%p199) target = $region32
        $region31: #{tpu_custom_call.1} parent=23 // pred_region
          %p202 = scmp.lt.s32.totalorder %s20, 1
          %s203 = scalar_select %p202, %s20, 1
          %s204 = smul.addr %s203, 4
          %s205 = scalar_lea.vmem %s2, %s204
        $region32: #{tpu_custom_call.1} parent=23 // pred_fallthru
          _
      $region24: #{tpu_custom_call.1} parent=5 // pred_fallthru
        _
      %p206 = scmp.le.s32.totalorder 1, %s13
      %p207 = scmp.lt.s32.totalorder %s13, 3
      %p208 = pnand %p206, %p207
      %p209 = pneg %p208
      // Predicated region
      $region33: #{tpu_custom_call.1} parent=5 // pred_check
        _
      $region34: #{tpu_custom_call.1} parent=5 // pred_check_branch
        %211 = sbr.rel (%p208) target = $region36
      $region35: #{tpu_custom_call.1} parent=5 // pred_region
        %s212 = ssub.s32 %s13, 1
        %s213 = smul.u32 16, %s22
        %p214 = scmp.lt.s32.totalorder %s213, 31
        %s215 = scalar_select %p214, %s213, 31
        %s216 = smul.addr %s215, 8
        %s217 = scalar_lea.vmem %s0, %s216
        %p218 = pneg %p51
        %p219 = pneg %p48
        %p220 = scmp.lt.s32.totalorder %s23, 0
        %s221 = scalar_select %p220, %s23, 0
        %s222 = smul.addr %s221, 8
        %s223 = scalar_lea.vmem %s1, %s222
        %p224 = pneg %p77
        %p225 = pneg %p74
        %p226 = scmp.lt.s32.totalorder %s22, 1
        %s227 = scalar_select %p226, %s22, 1
        %s228 = smul.addr %s227, 4
        %s229 = scalar_lea.vmem %s2, %s228
        %p230 = pneg %p103
        %p231 = pneg %p100
        %p232 = scmp.lt.s32.totalorder %s23, 0
        %s233 = scalar_select %p232, %s23, 0
        %s234 = smul.addr %s233, 8
        %s235 = scalar_lea.vmem %s3, %s234
        %p236 = pneg %p129
        %p237 = pneg %p126
        %p238 = pneg %p157
        %p239 = pneg %p154
        %s240 = sand.u32 %s144, 1
        %s241 = scalar_lea.sflag [#allocation3], %s240
        %s242 = sand.u32 %s144, 1
        %s243 = smul.addr %s242, 8
        %s244 = scalar_lea.vmem [#allocation2], %s243
        %s245 = smul.u32 16, %s22
        %p246 = scmp.lt.s32.totalorder %s245, 31
        %s247 = scalar_select %p246, %s245, 31
        %s248 = smul.addr %s247, 8
        %s249 = scalar_lea.vmem %s0, %s248
        %s250 = smul.u32 16, %s22
        %p251 = scmp.lt.s32.totalorder %s23, 0
        %s252 = scalar_select %p251, %s23, 0
        %s253 = smul.addr %s252, 8
        %s254 = scalar_lea.vmem %s1, %s253
        %p255 = scmp.lt.s32.totalorder %s22, 1
        %s256 = scalar_select %p255, %s22, 1
        %s257 = smul.addr %s256, 4
        %s258 = scalar_lea.vmem %s2, %s257
        %p259 = scmp.lt.s32.totalorder %s23, 0
        %s260 = scalar_select %p259, %s23, 0
        %s261 = smul.addr %s260, 8
        %s262 = scalar_lea.vmem %s3, %s261
        %v263 = vld [vmem:[%s249] sm:$0xff]
        %v264 = vld [vmem:[%s249 + $0x8] sm:$0xff]
        %v265 = vld [vmem:[%s249 + $0x10] sm:$0xff]
        %v266 = vld [vmem:[%s249 + $0x18] sm:$0xff]
        %v267 = vld [vmem:[%s249 + $0x20] sm:$0xff]
        %v268 = vld [vmem:[%s249 + $0x28] sm:$0xff]
        %v269 = vld [vmem:[%s249 + $0x30] sm:$0xff]
        %v270 = vld [vmem:[%s249 + $0x38] sm:$0xff]
        %v271 = vld [vmem:[%s249 + $0x40] sm:$0xff]
        %v272 = vld [vmem:[%s249 + $0x48] sm:$0xff]
        %v273 = vld [vmem:[%s249 + $0x50] sm:$0xff]
        %v274 = vld [vmem:[%s249 + $0x58] sm:$0xff]
        %v275 = vld [vmem:[%s249 + $0x60] sm:$0xff]
        %v276 = vld [vmem:[%s249 + $0x68] sm:$0xff]
        %v277 = vld [vmem:[%s249 + $0x70] sm:$0xff]
        %v278 = vld [vmem:[%s249 + $0x78] sm:$0xff]
        %v279 = vld [vmem:[%s254] sm:$0xff]
        %v280 = vpack.c.bf16 %v264, %v263
        %v281 = vpack.c.bf16 %v266, %v265
        %v282 = vpack.c.bf16 %v268, %v267
        %v283 = vpack.c.bf16 %v270, %v269
        %v284 = vpack.c.bf16 %v272, %v271
        %v285 = vpack.c.bf16 %v274, %v273
        %v286 = vpack.c.bf16 %v276, %v275
        %v287 = vpack.c.bf16 %v278, %v277
        %v288 = vunpack.c.l.bf16 %v280
        %v289 = vunpack.c.h.bf16 %v280
        %v290 = vunpack.c.l.bf16 %v281
        %v291 = vunpack.c.h.bf16 %v281
        %v292 = vunpack.c.l.bf16 %v282
        %v293 = vunpack.c.h.bf16 %v282
        %v294 = vunpack.c.l.bf16 %v283
        %v295 = vunpack.c.h.bf16 %v283
        %v296 = vunpack.c.l.bf16 %v284
        %v297 = vunpack.c.h.bf16 %v284
        %v298 = vunpack.c.l.bf16 %v285
        %v299 = vunpack.c.h.bf16 %v285
        %v300 = vunpack.c.l.bf16 %v286
        %v301 = vunpack.c.h.bf16 %v286
        %v302 = vunpack.c.l.bf16 %v287
        %v303 = vunpack.c.h.bf16 %v287
        %v304 = vsub.f32 %v263, %v288
        %v305 = vsub.f32 %v264, %v289
        %v306 = vsub.f32 %v265, %v290
        %v307 = vsub.f32 %v266, %v291
        %v308 = vsub.f32 %v267, %v292
        %v309 = vsub.f32 %v268, %v293
        %v310 = vsub.f32 %v269, %v294
        %v311 = vsub.f32 %v270, %v295
        %v312 = vsub.f32 %v271, %v296
        %v313 = vsub.f32 %v272, %v297
        %v314 = vsub.f32 %v273, %v298
        %v315 = vsub.f32 %v274, %v299
        %v316 = vsub.f32 %v275, %v300
        %v317 = vsub.f32 %v276, %v301
        %v318 = vsub.f32 %v277, %v302
        %v319 = vsub.f32 %v278, %v303
        %vm320 = vcmask 261120
        %v322 = vsel %vm320, %v279, 0
        %v325 = vsel %vm320, %v304, 0
        %v328 = vsel %vm320, %v305, 0
        %v331 = vsel %vm320, %v306, 0
        %v334 = vsel %vm320, %v307, 0
        %v337 = vsel %vm320, %v308, 0
        %v340 = vsel %vm320, %v309, 0
        %v343 = vsel %vm320, %v310, 0
        %v346 = vsel %vm320, %v311, 0
        %v349 = vsel %vm320, %v312, 0
        %v352 = vsel %vm320, %v313, 0
        %v355 = vsel %vm320, %v314, 0
        %v358 = vsel %vm320, %v315, 0
        %v361 = vsel %vm320, %v316, 0
        %v364 = vsel %vm320, %v317, 0
        %v367 = vsel %vm320, %v318, 0
        %v370 = vsel %vm320, %v319, 0
        %372 = vmatprep.subr.mxu0 0.0
        %373 = vmatpush1.xpose.msra.mxu0 %v325
        %374 = vmatprep.subr.mxu0 0.0
        %375 = vmatpush1.xpose.msra.mxu0 %v328
        %376 = vmatprep.subr.mxu0 0.0
        %377 = vmatpush1.xpose.msra.mxu0 %v331
        %378 = vmatprep.subr.mxu0 0.0
        %379 = vmatpush1.xpose.msra.mxu0 %v334
        %380 = vmatprep.subr.mxu0 0.0
        %381 = vmatpush1.xpose.msra.mxu0 %v337
        %382 = vmatprep.subr.mxu0 0.0
        %383 = vmatpush1.xpose.msra.mxu0 %v340
        %384 = vmatprep.subr.mxu0 0.0
        %385 = vmatpush1.xpose.msra.mxu0 %v343
        %386 = vmatprep.subr.mxu0 0.0
        %387 = vmatpush1.xpose.msra.mxu0 %v346
        %388 = vmatprep.subr.mxu0 0.0
        %389 = vmatpush1.xpose.msra.mxu0 %v349
        %390 = vmatprep.subr.mxu0 0.0
        %391 = vmatpush1.xpose.msra.mxu0 %v352
        %392 = vmatprep.subr.mxu0 0.0
        %393 = vmatpush1.xpose.msra.mxu0 %v355
        %394 = vmatprep.subr.mxu0 0.0
        %395 = vmatpush1.xpose.msra.mxu0 %v358
        %396 = vmatprep.subr.mxu0 0.0
        %397 = vmatpush1.xpose.msra.mxu0 %v361
        %398 = vmatprep.subr.mxu0 0.0
        %399 = vmatpush1.xpose.msra.mxu0 %v364
        %400 = vmatprep.subr.mxu0 0.0
        %401 = vmatpush1.xpose.msra.mxu0 %v367
        %402 = vmatprep.subr.mxu0 0.0
        %403 = vmatpush1.xpose.msra.mxu0 %v370
        %404 = vmatprep.subr.mxu0 0.0
        %405 = vmatpush1.xpose.msra.mxu0 0.0
        %406 = vmatprep.subr.mxu0 0.0
        %407 = vmatpush1.xpose.msra.mxu0 0.0
        %408 = vmatprep.subr.mxu0 0.0
        %409 = vmatpush1.xpose.msra.mxu0 0.0
        %410 = vmatprep.subr.mxu0 0.0
        %411 = vmatpush1.xpose.msra.mxu0 0.0
        %412 = vmatprep.subr.mxu0 0.0
        %413 = vmatpush1.xpose.msra.mxu0 0.0
        %414 = vmatprep.subr.mxu0 0.0
        %415 = vmatpush1.xpose.msra.mxu0 0.0
        %416 = vmatprep.subr.mxu0 0.0
        %417 = vmatpush1.xpose.msra.mxu0 0.0
        %418 = vmatprep.subr.mxu0 0.0
        %419 = vmatpush1.xpose.msra.mxu0 0.0
        %420 = vmatprep.subr.mxu0 0.0
        %421 = vmatpush1.xpose.msra.mxu0 0.0
        %422 = vmatprep.subr.mxu0 0.0
        %423 = vmatpush1.xpose.msra.mxu0 0.0
        %424 = vmatprep.subr.mxu0 0.0
        %425 = vmatpush1.xpose.msra.mxu0 0.0
        %426 = vmatprep.subr.mxu0 0.0
        %427 = vmatpush1.xpose.msra.mxu0 0.0
        %428 = vmatprep.subr.mxu0 0.0
        %429 = vmatpush1.xpose.msra.mxu0 0.0
        %430 = vmatprep.subr.mxu0 0.0
        %431 = vmatpush1.xpose.msra.mxu0 0.0
        %432 = vmatprep.subr.mxu0 0.0
        %433 = vmatpush1.xpose.msra.mxu0 0.0
        %434 = vmatprep.subr.mxu0 0.0
        %435 = vmatpush1.xpose.msra.mxu0 0.0
        %436 = vmatprep.mubr.f32.mxu0 0.0
        %437 = vmatmul.mubr.f32.gmra.mrb[0].mxu0 %v322
        %v438 = vpop.f32.mrb[0].mxu0
        %v439 = vadd.f32 0.0, %v438
        %v440 = vpop.f32.mrb[0].mxu0
        %441 = vdwg.mxu0
        %v443 = vsel %vm320, %v288, 0
        %v446 = vsel %vm320, %v289, 0
        %v449 = vsel %vm320, %v290, 0
        %v452 = vsel %vm320, %v291, 0
        %v455 = vsel %vm320, %v292, 0
        %v458 = vsel %vm320, %v293, 0
        %v461 = vsel %vm320, %v294, 0
        %v464 = vsel %vm320, %v295, 0
        %v467 = vsel %vm320, %v296, 0
        %v470 = vsel %vm320, %v297, 0
        %v473 = vsel %vm320, %v298, 0
        %v476 = vsel %vm320, %v299, 0
        %v479 = vsel %vm320, %v300, 0
        %v482 = vsel %vm320, %v301, 0
        %v485 = vsel %vm320, %v302, 0
        %v488 = vsel %vm320, %v303, 0
        %490 = vmatprep.subr.mxu0 0.0
        %491 = vmatpush1.xpose.msra.mxu0 %v443
        %492 = vmatprep.subr.mxu0 0.0
        %493 = vmatpush1.xpose.msra.mxu0 %v446
        %494 = vmatprep.subr.mxu0 0.0
        %495 = vmatpush1.xpose.msra.mxu0 %v449
        %496 = vmatprep.subr.mxu0 0.0
        %497 = vmatpush1.xpose.msra.mxu0 %v452
        %498 = vmatprep.subr.mxu0 0.0
        %499 = vmatpush1.xpose.msra.mxu0 %v455
        %500 = vmatprep.subr.mxu0 0.0
        %501 = vmatpush1.xpose.msra.mxu0 %v458
        %502 = vmatprep.subr.mxu0 0.0
        %503 = vmatpush1.xpose.msra.mxu0 %v461
        %504 = vmatprep.subr.mxu0 0.0
        %505 = vmatpush1.xpose.msra.mxu0 %v464
        %506 = vmatprep.subr.mxu0 0.0
        %507 = vmatpush1.xpose.msra.mxu0 %v467
        %508 = vmatprep.subr.mxu0 0.0
        %509 = vmatpush1.xpose.msra.mxu0 %v470
        %510 = vmatprep.subr.mxu0 0.0
        %511 = vmatpush1.xpose.msra.mxu0 %v473
        %512 = vmatprep.subr.mxu0 0.0
        %513 = vmatpush1.xpose.msra.mxu0 %v476
        %514 = vmatprep.subr.mxu0 0.0
        %515 = vmatpush1.xpose.msra.mxu0 %v479
        %516 = vmatprep.subr.mxu0 0.0
        %517 = vmatpush1.xpose.msra.mxu0 %v482
        %518 = vmatprep.subr.mxu0 0.0
        %519 = vmatpush1.xpose.msra.mxu0 %v485
        %520 = vmatprep.subr.mxu0 0.0
        %521 = vmatpush1.xpose.msra.mxu0 %v488
        %522 = vmatprep.subr.mxu0 0.0
        %523 = vmatpush1.xpose.msra.mxu0 0.0
        %524 = vmatprep.subr.mxu0 0.0
        %525 = vmatpush1.xpose.msra.mxu0 0.0
        %526 = vmatprep.subr.mxu0 0.0
        %527 = vmatpush1.xpose.msra.mxu0 0.0
        %528 = vmatprep.subr.mxu0 0.0
        %529 = vmatpush1.xpose.msra.mxu0 0.0
        %530 = vmatprep.subr.mxu0 0.0
        %531 = vmatpush1.xpose.msra.mxu0 0.0
        %532 = vmatprep.subr.mxu0 0.0
        %533 = vmatpush1.xpose.msra.mxu0 0.0
        %534 = vmatprep.subr.mxu0 0.0
        %535 = vmatpush1.xpose.msra.mxu0 0.0
        %536 = vmatprep.subr.mxu0 0.0
        %537 = vmatpush1.xpose.msra.mxu0 0.0
        %538 = vmatprep.subr.mxu0 0.0
        %539 = vmatpush1.xpose.msra.mxu0 0.0
        %540 = vmatprep.subr.mxu0 0.0
        %541 = vmatpush1.xpose.msra.mxu0 0.0
        %542 = vmatprep.subr.mxu0 0.0
        %543 = vmatpush1.xpose.msra.mxu0 0.0
        %544 = vmatprep.subr.mxu0 0.0
        %545 = vmatpush1.xpose.msra.mxu0 0.0
        %546 = vmatprep.subr.mxu0 0.0
        %547 = vmatpush1.xpose.msra.mxu0 0.0
        %548 = vmatprep.subr.mxu0 0.0
        %549 = vmatpush1.xpose.msra.mxu0 0.0
        %550 = vmatprep.subr.mxu0 0.0
        %551 = vmatpush1.xpose.msra.mxu0 0.0
        %552 = vmatprep.subr.mxu0 0.0
        %553 = vmatpush1.xpose.msra.mxu0 0.0
        %554 = vmatprep.mubr.f32.mxu0 0.0
        %555 = vmatmul.mubr.f32.gmra.mrb[0].mxu0 %v322
        %v556 = vpop.f32.mrb[0].mxu0
        %v557 = vadd.f32 %v439, %v556
        %v558 = vpop.f32.mrb[0].mxu0
        %559 = vdwg.mxu0
        %v560 = vsub.f32 1.0, %v557
        %v561 = vmul.f32 %v560, %v560
        %v562 = vmul.f32 %v561, 0.25
        %v563 = vadd.f32 %v557, 1e-08
        %v564 = vlog2.pop %v563
        %v565 = vmul.f32 %v564, 0.6931472
        %v566 = vsub.f32 0.0, %v565
        %v567 = vmul.f32 %v562, %v566
        %v568 = vmul.f32 %v557, %v557
        %v569 = vmul.f32 %v568, 0.75
        %v570 = vadd.f32 %v560, 1e-08
        %v571 = vlog2.pop %v570
        %v572 = vmul.f32 %v571, 0.6931472
        %v573 = vsub.f32 0.0, %v572
        %v574 = vmul.f32 %v569, %v573
        %v575 = vsub.f32 %v567, %v574
        %v576 = vld [vmem:[%s258] sm:$0xf]
        %v577 = vld [vmem:[%s262] sm:$0xff]
        %579 = vset.pattern.permute.xlu0 0
        %580 = vperm.xlu0 %579, %v577
        %v581 = vpop.permute.xlu0 %580
        %v583 = vlaneseq
        %v584 = vshrl.u32 %v583, 7
        %v585 = vsub.s32 0, %v584
        %v586 = vrot.slane %v576, %v585
        %v587 = vsub.f32 %v581, %v586
        %v588 = vand.u32 2147483647, %v587
        %589 = vset.pattern.permute.xlu0 1
        %590 = vperm.xlu0 %589, %v577
        %v591 = vpop.permute.xlu0 %590
        %v593 = vlaneseq
        %v594 = vshrl.u32 %v593, 7
        %v595 = vsub.s32 1, %v594
        %v596 = vrot.slane %v576, %v595
        %v597 = vsub.f32 %v591, %v596
        %v598 = vand.u32 2147483647, %v597
        %v599 = vadd.f32 %v588, %v598
        %600 = vset.pattern.permute.xlu0 2
        %601 = vperm.xlu0 %600, %v577
        %v602 = vpop.permute.xlu0 %601
        %v604 = vlaneseq
        %v605 = vshrl.u32 %v604, 7
        %v606 = vsub.s32 2, %v605
        %v607 = vrot.slane %v576, %v606
        %v608 = vsub.f32 %v602, %v607
        %v609 = vand.u32 2147483647, %v608
        %v610 = vadd.f32 %v599, %v609
        %611 = vset.pattern.permute.xlu0 3
        %612 = vperm.xlu0 %611, %v577
        %v613 = vpop.permute.xlu0 %612
        %v615 = vlaneseq
        %v616 = vshrl.u32 %v615, 7
        %v617 = vsub.s32 3, %v616
        %v618 = vrot.slane %v576, %v617
        %v619 = vsub.f32 %v613, %v618
        %v620 = vand.u32 2147483647, %v619
        %v621 = vadd.f32 %v610, %v620
        %v622 = vmul.f32 %v576, 0.5
        %v624 = vrot.slane %v622, 2
        %v626 = vsub.f32 %v576, %v624
        %v627 = vadd.f32 %v576, %v624
        %v628 = vmul.f32 %v577, 0.5
        %630 = vrot.lane.b32.xlu0 %v628, 126
        %v631 = vpop.permute.xlu0 %630
        %v633 = vsub.f32 %v577, %v631
        %v634 = vadd.f32 %v577, %v631
        %v635 = vsub.f32 %v627, %v626
        %v637 = vrot.slane %v635, 1
        %v639 = vmul.f32 %v635, %v637
        %v640 = vsub.f32 %v634, %v633
        %642 = vrot.lane.b32.xlu0 %v640, 127
        %v643 = vpop.permute.xlu0 %642
        %v645 = vmul.f32 %v640, %v643
        %v646 = vlaneseq
        %v647 = vshrl.u32 %v646, 7
        %v648 = vsub.s32 0, %v647
        %v649 = vrot.slane %v627, %v648
        %651 = vset.pattern.permute.xlu0 0
        %652 = vperm.xlu0 %651, %v634
        %v653 = vpop.permute.xlu0 %652
        %v655 = vmin.f32 %v649, %v653
        %v656 = vlaneseq
        %v657 = vshrl.u32 %v656, 7
        %v658 = vsub.s32 0, %v657
        %v659 = vrot.slane %v626, %v658
        %661 = vset.pattern.permute.xlu0 0
        %662 = vperm.xlu0 %661, %v633
        %v663 = vpop.permute.xlu0 %662
        %v665 = vmax.f32 %v659, %v663
        %v666 = vsub.f32 %v655, %v665
        %v667 = vmax.f32 %v666, 0.0
        %v668 = vlaneseq
        %v669 = vshrl.u32 %v668, 7
        %v670 = vsub.s32 1, %v669
        %v671 = vrot.slane %v627, %v670
        %672 = vset.pattern.permute.xlu0 1
        %673 = vperm.xlu0 %672, %v634
        %v674 = vpop.permute.xlu0 %673
        %v676 = vmin.f32 %v671, %v674
        %v677 = vlaneseq
        %v678 = vshrl.u32 %v677, 7
        %v679 = vsub.s32 1, %v678
        %v680 = vrot.slane %v626, %v679
        %681 = vset.pattern.permute.xlu0 1
        %682 = vperm.xlu0 %681, %v633
        %v683 = vpop.permute.xlu0 %682
        %v685 = vmax.f32 %v680, %v683
        %v686 = vsub.f32 %v676, %v685
        %v687 = vmax.f32 %v686, 0.0
        %v688 = vmul.f32 %v667, %v687
        %v689 = vlaneseq
        %v690 = vshrl.u32 %v689, 7
        %v691 = vsub.s32 0, %v690
        %v692 = vrot.slane %v639, %v691
        %694 = vset.pattern.permute.xlu0 0
        %695 = vperm.xlu0 %694, %v645
        %v696 = vpop.permute.xlu0 %695
        %v698 = vadd.f32 %v692, %v696
        %v699 = vsub.f32 %v698, %v688
        %v700 = vmax.f32 %v699, 1e-09
        %v701 = vrcp.pop %v700
        %v702 = vmul.f32 %v688, %v701
        %v703 = vmax.f32 %v649, %v653
        %v704 = vmin.f32 %v659, %v663
        %v705 = vsub.f32 %v703, %v704
        %v706 = vmax.f32 %v705, 0.0
        %v707 = vmax.f32 %v671, %v674
        %v708 = vmin.f32 %v680, %v683
        %v709 = vsub.f32 %v707, %v708
        %v710 = vmax.f32 %v709, 0.0
        %v711 = vmul.f32 %v706, %v710
        %v712 = vsub.f32 %v711, %v699
        %v713 = vmax.f32 %v711, 1e-09
        %v714 = vrcp.pop %v713
        %v715 = vmul.f32 %v712, %v714
        %v716 = vsub.f32 %v702, %v715
        %v717 = vadd.f32 %v621, %v575
        %v718 = vsub.f32 %v717, %v716
        %719 = vst [vmem:[%s244] sm:$0xff] %v718
        %s720 = sand.u32 %s144, 1
        %s721 = scalar_lea.sflag [#allocation3], %s720
        %s722 = sand.u32 %s144, 1
        %s723 = smul.addr %s722, 8
        %s724 = scalar_lea.vmem [#allocation2], %s723
        // Predicated region
        $region37: #{tpu_custom_call.1} parent=35 // pred_check
          %p725 = pneg %p154
        $region38: #{tpu_custom_call.1} parent=35 // pred_check_branch
          %727 = sbr.rel (%p725) target = $region40
        $region39: #{tpu_custom_call.1} parent=35 // pred_region
          %s729 = ssub.s32 128, 128
          %730 = vsyncadd %s721, %s729
          %s731 = smul.addr %s23, 2
          %s732 = sadd.s32 %s22, %s731
          %s733 = smul.addr %s732, 128
          %s734 = scalar_lea.hbm %s4, %s733
          %s736 = sshll.u32 %s724, 4
          %s737 = int_to_ptr.vmem [resolvable:$true] %s736
          %739 = dma.vmem_to_hbm [thread:$0]  %s737, 128, %s734, %s721
        $region40: #{tpu_custom_call.1} parent=35 // pred_fallthru
          _
      $region36: #{tpu_custom_call.1} parent=5 // pred_fallthru
        _
      %p740 = scmp.le.s32.totalorder 2, %s13
      // Predicated region
      $region41: #{tpu_custom_call.1} parent=5 // pred_check
        %p741 = pneg %p740
      $region42: #{tpu_custom_call.1} parent=5 // pred_check_branch
        %743 = sbr.rel (%p741) target = $region44
      $region43: #{tpu_custom_call.1} parent=5 // pred_region
        %s744 = ssub.s32 %s13, 2
        // Predicated region
        $region45: #{tpu_custom_call.1} parent=43 // pred_check
          %p745 = pneg %p160
        $region46: #{tpu_custom_call.1} parent=43 // pred_check_branch
          %747 = sbr.rel (%p745) target = $region48
        $region47: #{tpu_custom_call.1} parent=43 // pred_region
          %s748 = sand.u32 %s145, 1
          %s749 = scalar_lea.sflag [#allocation3], %s748
          %s750 = sand.u32 %s145, 1
          %s751 = smul.addr %s750, 8
          %s752 = scalar_lea.vmem [#allocation2], %s751
          %753 = dma.done %s749, 128
        $region48: #{tpu_custom_call.1} parent=43 // pred_fallthru
          _
      $region44: #{tpu_custom_call.1} parent=5 // pred_fallthru
        _
    $region6: #{tpu_custom_call.1} parent=1 // loop_footer
      %s17 = sadd.s32 1, %s13
    $region7: #{tpu_custom_call.1} parent=1 // loop_footer_branch
      %12 = sbr.rel target = $region3
    $region8: #{tpu_custom_call.1} parent=1 // loop_exit
      _
    %754 = vsyncpa [#allocation3], 1
    %s755 = scalar_lea.sflag [#allocation3], 1
    %756 = vsyncpa %s755, 1

</llo_original>
